<compile_context>
chip_gen: v7x
topology: tpu7x:2x2x1
jax: 0.10.0
libtpu: 0.0.40
codegen_flags: <defaults>
</compile_context>

<pallas_src>
import math

import jax
import jax.numpy as jnp
from jax.experimental import pallas as pl
from jax.experimental.pallas import tpu as pltpu


# ---------------------------------------------------------------------------
# One-time init (mirrors PositionalEncoding.__init__)
# ---------------------------------------------------------------------------

def _build_encoding(d_model: int, max_len: int = 5000) -> jnp.ndarray:
    """Sinusoidal table, shape (max_len, d_model), f32. Handles odd d_model."""
    position = jnp.arange(0, max_len, dtype=jnp.float32)[:, None]             # (max_len, 1)
    div_term = jnp.exp(
        jnp.arange(0, d_model, 2, dtype=jnp.float32) * (-math.log(10000.0) / d_model)
    )                                                                          # (ceil(d/2),)
    args = position * div_term                                                 # (max_len, ceil(d/2))
    enc = jnp.zeros((max_len, d_model), dtype=jnp.float32)
    enc = enc.at[:, 0::2].set(jnp.sin(args))
    enc = enc.at[:, 1::2].set(jnp.cos(args)[:, : d_model // 2])                # odd-d_model safe
    return enc


def _round_up(n: int, m: int) -> int:
    return ((n + m - 1) // m) * m


def init_positional_encoding(d_model: int, max_len: int = 5000, dtype=jnp.float32):
    """Build the table once.  Returns (enc_2d, enc_flat):

      enc_2d:   (max_len, d_model) table, already in the activation dtype.
      enc_flat: lane-dense (padded_len * d_model // 128, 128) view of the same table
                (zero-padded rows at the end), or None when d_model % 128 == 0.
    """
    enc = _build_encoding(d_model, max_len).astype(dtype)
    enc_flat = None
    if d_model % 128 != 0:
        period = 128 // math.gcd(d_model, 128)      # table rows per full 128-lane cycle
        padded_len = _round_up(max_len, period)
        enc_padded = enc
        if padded_len != max_len:
            pad = jnp.zeros((padded_len - max_len, d_model), dtype=dtype)
            enc_padded = jnp.concatenate([enc, pad], axis=0)
        enc_flat = enc_padded.reshape(padded_len * d_model // 128, 128)
    return enc, enc_flat


# ---------------------------------------------------------------------------
# Pallas kernel + tiling policy
# ---------------------------------------------------------------------------

_TINY_FALLBACK_BYTES = 256 * 1024       # below this a fused XLA add beats the launch cost
_TARGET_STEP_BYTES = 2 * 1024 * 1024    # aim to move >= ~2 MiB of x per grid step

_vmem_budget_cache = None


def _vmem_budget():
    """(working_set_bytes, vmem_limit_bytes), generation-aware."""
    global _vmem_budget_cache
    if _vmem_budget_cache is None:
        try:
            cap = int(pltpu.get_tpu_info().vmem_capacity_bytes)
        except Exception:                               # conservative default
            cap = 64 * 1024 * 1024
        # v7x (64 MiB VMEM): limit 48 MiB / working 24 MiB; v5e/v6e (128 MiB): 80 / 40 MiB.
        limit = min(cap * 3 // 4, 80 * 1024 * 1024)
        working = min(limit // 2, 40 * 1024 * 1024)
        _vmem_budget_cache = (working, limit)
    return _vmem_budget_cache


def _choose_tiles(B: int, R: int, C: int, itemsize: int, working_budget: int):
    """Pick (tB, tR): batch-block and row-tile sizes.

    Working set ~= 2*x + 2*out (batch-block tile) + 2*enc (row tile), all double-buffered:
        (4*tB + 2) * tR * C * itemsize
    """
    pack = 8 * max(1, 4 // itemsize)        # sublane packing: 8 f32, 16 bf16, 32 int8/fp8
    row_bytes = C * itemsize

    def ws(tb, tr):
        return (4 * tb + 2) * tr * row_bytes

    # Row tile: whole (padded) row extent if it fits with tB=1, else largest pack multiple.
    tR = _round_up(R, pack)
    if ws(1, tR) > working_budget:
        tR = max(pack, (working_budget // (6 * row_bytes)) // pack * pack)

    # Batch blocking: fold batch elements until each step moves ~_TARGET_STEP_BYTES.
    tB = 1
    while tB < B and tB * tR * row_bytes < _TARGET_STEP_BYTES:
        nb = min(B, tB * 2)
        if ws(nb, tR) > working_budget:
            break
        tB = nb

    # v7x has 2 TensorCores: keep >= 2 grid steps on a parallel axis whenever possible.
    def steps(tb, tr):
        return -(-R // tr) * -(-B // tb)

    if steps(tB, tR) < 2:
        if tB > 1:
            tB = -(-tB // 2)
        elif R > pack:
            tR = max(pack, _round_up(-(-R // 2), pack))
    return tB, tR


def _pos_enc_kernel(x_ref, enc_ref, o_ref):
    # x_ref / o_ref: (tB, tR, C) batch-block tile; enc_ref: (tR, C) shared row tile.
    o_ref[...] = (x_ref[...] + enc_ref[...][None, :, :]).astype(o_ref.dtype)


def _run_pallas_add(x3: jnp.ndarray, enc_table: jnp.ndarray) -> jnp.ndarray:
    """x3: (B, R, C); enc_table: (T, C) with T >= R. Returns x3 + enc_table[:R][None]."""
    B, R, C = x3.shape
    itemsize = jnp.dtype(x3.dtype).itemsize
    working, limit = _vmem_budget()
    tB, tR = _choose_tiles(B, R, C, itemsize, working)
    grid = (pl.cdiv(R, tR), pl.cdiv(B, tB))   # batch-blocks innermost -> enc tile resident

    return pl.pallas_call(
        _pos_enc_kernel,
        out_shape=jax.ShapeDtypeStruct((B, R, C), x3.dtype),
        grid_spec=pltpu.PrefetchScalarGridSpec(
            num_scalar_prefetch=0,
            grid=grid,
            in_specs=[
                pl.BlockSpec((tB, tR, C), lambda r, b: (b, r, 0)),   # x batch-block tile
                pl.BlockSpec((tR, C), lambda r, b: (r, 0)),          # full table; only rows < R are touched
            ],
            out_specs=pl.BlockSpec((tB, tR, C), lambda r, b: (b, r, 0)),
        ),
        compiler_params=pltpu.CompilerParams(
            dimension_semantics=("parallel", "parallel"),
            vmem_limit_bytes=limit,
        ),
    )(x3, enc_table)


# ---------------------------------------------------------------------------
# Forward (mirrors PositionalEncoding.forward)
# ---------------------------------------------------------------------------

def positional_encoding_forward(x: jnp.ndarray, enc_params, *, force_kernel: bool = False):
    """x: (B, S, D); enc_params = init_positional_encoding(D, max_len, dtype=x.dtype)."""
    enc2, enc_flat = enc_params
    B, S, D = x.shape
    max_len, d_enc = enc2.shape
    if d_enc != D:
        raise ValueError(f"d_model mismatch: x has D={D}, encoding has {d_enc}")
    if S > max_len:
        raise ValueError(f"seq_len {S} exceeds max_len {max_len} of the positional table")

    # Rare path: table dtype != activation dtype -> plain XLA add (avoid casting the
    # whole max_len table every call).
    if enc2.dtype != x.dtype:
        return x + enc2[:S, :].astype(x.dtype)[None]

    # Tiny inputs: pallas_call launch + pipeline prologue would dominate; let XLA fuse it.
    if not force_kernel and x.size * jnp.dtype(x.dtype).itemsize < _TINY_FALLBACK_BYTES:
        return x + enc2[None, :S, :]

    if D % 128 == 0:
        # Already lane-dense; pass the full table, BlockSpec picks the first S rows.
        return _run_pallas_add(x, enc2)

    if (S * D) % 128 == 0 and enc_flat is not None:
        # Lane-dense path: present a last dim of exactly 128 so stores are unmasked vst.
        # x.reshape is a free row-major bitcast; enc_flat was pre-flattened at init with
        # the identical factorization, so row r / lane l of both map to the same (s, d).
        rows = (S * D) // 128
        out = _run_pallas_add(x.reshape(B, rows, 128), enc_flat)
        return out.reshape(B, S, D)

    # Direct path for shapes that don't flatten to 128 lanes evenly (masked stores).
    # TODO(synk): could flatten to 128-lane chunks of (B, S*D) for better lane density;
    # such shapes are tiny in practice and normally hit the XLA fallback above.
    return _run_pallas_add(x, enc2)


# ---------------------------------------------------------------------------
# Demo / self-test
# ---------------------------------------------------------------------------

if __name__ == "__main__":
    MAX_LEN = 5000
    key = jax.random.PRNGKey(0)

    # Small (B, S, D) shapes consistent with the module's forward, covering:
    #  - tiny fallback + forced-kernel lane-dense path (D=32)
    #  - forced-kernel direct path (D=128) and odd-d_model direct path (D=33)
    #  - a medium shape that takes the Pallas path naturally (>= 256 KiB)
    configs = [(2, 8, 32), (2, 64, 128), (2, 10, 33), (2, 512, 128)]

    for i, (B, S, D) in enumerate(configs):
        key, sub = jax.random.split(key)
        x = jax.random.normal(sub, (B, S, D), dtype=jnp.float32)
        params = init_positional_encoding(D, MAX_LEN, dtype=x.dtype)

        ref = x + params[0][None, :S, :]

        out = jax.block_until_ready(positional_encoding_forward(x, params))
        assert out.shape == (B, S, D)
        assert jnp.allclose(out, ref, atol=1e-6), f"mismatch (auto path) for config {i}"

        out_k = jax.block_until_ready(
            positional_encoding_forward(x, params, force_kernel=True))
        assert jnp.allclose(out_k, ref, atol=1e-6), f"mismatch (kernel path) for config {i}"

    print("KERNEL_OK")
</pallas_src>

<mosaic_0001>
module attributes {stable_mosaic.version = 11 : i64} {
  func.func @_pos_enc_kernel(%arg0: i32, %arg1: i32, %arg2: memref<1x8x128xf32, #tpu.memory_space<vmem>>, %arg3: memref<8x128xf32, #tpu.memory_space<vmem>>, %arg4: memref<1x8x128xf32, #tpu.memory_space<vmem>>) attributes {dimension_semantics = [#tpu.dimension_semantics<parallel>, #tpu.dimension_semantics<parallel>], iteration_bounds = array<i64: 1, 2>, scalar_prefetch = 0 : i64, scratch_operands = 0 : i64, tpu.core_type = #tpu.core_type<tc>, window_params = [{transform_indices = @transform_0, window_bounds = array<i64: 1, 8, 128>}, {transform_indices = @transform_1, window_bounds = array<i64: 8, 128>}, {transform_indices = @transform_2, window_bounds = array<i64: 1, 8, 128>}]} {
    %c0 = arith.constant 0 : index
    %c0_0 = arith.constant 0 : index
    %c0_1 = arith.constant 0 : index
    %0 = vector.load %arg2[%c0, %c0_0, %c0_1] : memref<1x8x128xf32, #tpu.memory_space<vmem>>, vector<1x8x128xf32>
    %c0_2 = arith.constant 0 : index
    %c0_3 = arith.constant 0 : index
    %1 = vector.load %arg3[%c0_2, %c0_3] : memref<8x128xf32, #tpu.memory_space<vmem>>, vector<8x128xf32>
    %2 = vector.shape_cast %1 : vector<8x128xf32> to vector<1x8x128xf32>
    %3 = arith.addf %0, %2 : vector<1x8x128xf32>
    %c0_4 = arith.constant 0 : index
    %c0_5 = arith.constant 0 : index
    %c0_6 = arith.constant 0 : index
    %4 = vector.load %arg4[%c0_4, %c0_5, %c0_6] : memref<1x8x128xf32, #tpu.memory_space<vmem>>, vector<1x8x128xf32>
    tpu.vector_store %arg4[%c0_4, %c0_5, %c0_6], %3 {strides = array<i32>} : memref<1x8x128xf32, #tpu.memory_space<vmem>>, vector<1x8x128xf32>,
    return
  }
  func.func @transform_0(%arg0: i32, %arg1: i32) -> (i32, i32, i32) {
    %c0_i32 = arith.constant 0 : i32
    %c0_i32_0 = arith.constant 0 : i32
    return %arg1, %arg0, %c0_i32 : i32, i32, i32
  }
  func.func @transform_1(%arg0: i32, %arg1: i32) -> (i32, i32) {
    %c0_i32 = arith.constant 0 : i32
    %c0_i32_0 = arith.constant 0 : i32
    return %arg0, %c0_i32 : i32, i32
  }
  func.func @transform_2(%arg0: i32, %arg1: i32) -> (i32, i32, i32) {
    %c0_i32 = arith.constant 0 : i32
    %c0_i32_0 = arith.constant 0 : i32
    return %arg1, %arg0, %c0_i32 : i32, i32, i32
  }
}

</mosaic_0001>

<llo_original>
// kernel: tpu_custom_call.1
$region0: #{tpu_custom_call.1}
  #allocation0 [shape = 'u32[]', space=smem, size = 0x4, offset = 0x4, fixed_abs, tag = 'smem constant byte address 0x4 - core index']
  #allocation1 [shape = 'u32[144,128]{1,0:T(1,128)}', space=vmem, size = 0x12000, scoped, tag = 'internal scratch']
  %s0 = inlined_call_operand.hbm [shape: f32[2,2,128], index: 0, kind: input, shape index: {}]
  %s1 = inlined_call_operand.hbm [shape: f32[1250,128], index: 1, kind: input, shape index: {}]
  %s2 = inlined_call_operand.hbm [shape: f32[2,2,128], index: 2, kind: output, shape index: {}]
  %s3 = sld [smem:[#allocation0]]
  $region49: #{tpu_custom_call.1} parent=0
    _
  %s5 = ssub.s32 1, %s3
  %s6 = scalar_select 0, %s5, %s3
  $region1: #{tpu_custom_call.1} parent=0
    #allocation2 [shape = 'u8[8192]{0}', space=vmem, size = 0x2000, scoped, tag = 'input window, operand 0']
    #allocation3 [shape = 's32[2]{0}', space=sflag, size = 0x8, scoped, tag = 'scoped memory for tpu_custom_call.1']
    #allocation4 [shape = 's32[2]{0}', space=sflag, size = 0x8, scoped, tag = 'scoped memory for tpu_custom_call.1']
    #allocation5 [shape = 'u8[4096]{0}', space=vmem, size = 0x1000, scoped, tag = 'input window, operand 1, single buffered']
    #allocation6 [shape = 's32[1]{0}', space=sflag, size = 0x4, scoped, tag = 'scoped memory for tpu_custom_call.1']
    #allocation7 [shape = 'u8[8192]{0}', space=vmem, size = 0x2000, scoped, tag = 'output window, operand 0']
    %7 = vsyncpa [#allocation3], 0
    %s8 = scalar_lea.sflag [#allocation3], 1
    %9 = vsyncpa %s8, 0
    %10 = vsyncpa [#allocation6], 0
    %11 = vsyncpa [#allocation4], 0
    %s12 = scalar_lea.sflag [#allocation4], 1
    %13 = vsyncpa %s12, 0
    loop: start=0, step=1, limit=4
    $region2: #{tpu_custom_call.1} parent=1 // loop_pre_header
      _
    $region3: #{tpu_custom_call.1} parent=1 // loop_header
      %s15 = sphi 0, %s19
      %p16 = scmp.ge.s32.totalorder %s15, 4
      %s22 = sphi 0, %s34
      %s23 = sphi 0, %s30
      %s24 = sphi 0, %s22
      %s25 = sphi 0, %s23
      %s26 = sphi 0, %s24
      %s27 = sphi 0, %s25
      %s39 = sphi 0, %s41
      %s42 = sphi 0, %s39
      %s43 = sphi 0, %s42
      %s59 = sphi 0, %s43
      %s65 = sphi 0, %s67
      %s68 = sphi 0, %s65
      %s69 = sphi 0, %s68
      %s85 = sphi 0, %s69
      %s93 = sphi 0, %s95
      %s96 = sphi 0, %s93
      %s97 = sphi 0, %s96
      %s113 = sphi 0, %s97
    $region4: #{tpu_custom_call.1} parent=1 // loop_header_branch
      %18 = sbr.rel (%p16) target = $region8
    $region5: #{tpu_custom_call.1} parent=1 // loop_body
      %s20 = ssub.s32 %s15, 1
      %s21 = ssub.s32 %s15, 2
      %s28 = sadd.s32 1, %s23
      %p29 = scmp.ge.s32.totalorder %s28, 2
      %s30 = scalar_select %p29, 0, %s28
      %s31 = sadd.s32 1, %s22
      %s32 = scalar_select %p29, %s31, %s22
      %p33 = scmp.ge.s32.totalorder %s32, 1
      %s34 = scalar_select %p33, 0, %s32
      %s35 = ssub.s32 %s23, %s30
      %s36 = ssub.s32 %s22, %s34
      %s37 = sor.u32 %s35, %s36
      %p38 = scmp.eq.s32.totalorder %s37, 0
      %s40 = sadd.s32 %s39, 1
      %s41 = scalar_select %p38, %s39, %s40
      %p44 = pneg %p38
      %p45 = scmp.eq.s32.totalorder %s15, 1
      %p46 = por %p44, %p45
      %p47 = scmp.ne.s32.totalorder %s39, %s42
      %p48 = scmp.eq.s32.totalorder %s15, 0
      %p49 = por %p47, %p48
      %p50 = scmp.ne.s32.totalorder %s39, %s42
      %p51 = scmp.eq.s32.totalorder %s20, 1
      %p52 = por %p50, %p51
      %p53 = scmp.ne.s32.totalorder %s42, %s43
      %p54 = scmp.eq.s32.totalorder %s20, 0
      %p55 = por %p53, %p54
      %p56 = scmp.ne.s32.totalorder %s42, %s43
      %p57 = scmp.eq.s32.totalorder %s21, 1
      %p58 = por %p56, %p57
      %p60 = scmp.ne.s32.totalorder %s43, %s59
      %p61 = scmp.eq.s32.totalorder %s21, 0
      %p62 = por %p60, %p61
      %s63 = ssub.s32 %s22, %s34
      %p64 = scmp.eq.s32.totalorder %s63, 0
      %s66 = sadd.s32 %s65, 1
      %s67 = scalar_select %p64, %s65, %s66
      %p70 = pneg %p64
      %p71 = scmp.eq.s32.totalorder %s15, 1
      %p72 = por %p70, %p71
      %p73 = scmp.ne.s32.totalorder %s65, %s68
      %p74 = scmp.eq.s32.totalorder %s15, 0
      %p75 = por %p73, %p74
      %p76 = scmp.ne.s32.totalorder %s65, %s68
      %p77 = scmp.eq.s32.totalorder %s20, 1
      %p78 = por %p76, %p77
      %p79 = scmp.ne.s32.totalorder %s68, %s69
      %p80 = scmp.eq.s32.totalorder %s20, 0
      %p81 = por %p79, %p80
      %p82 = scmp.ne.s32.totalorder %s68, %s69
      %p83 = scmp.eq.s32.totalorder %s21, 1
      %p84 = por %p82, %p83
      %p86 = scmp.ne.s32.totalorder %s69, %s85
      %p87 = scmp.eq.s32.totalorder %s21, 0
      %p88 = por %p86, %p87
      %s89 = ssub.s32 %s23, %s30
      %s90 = ssub.s32 %s22, %s34
      %s91 = sor.u32 %s89, %s90
      %p92 = scmp.eq.s32.totalorder %s91, 0
      %s94 = sadd.s32 %s93, 1
      %s95 = scalar_select %p92, %s93, %s94
      %p98 = pneg %p92
      %p99 = scmp.eq.s32.totalorder %s15, 1
      %p100 = por %p98, %p99
      %p101 = scmp.ne.s32.totalorder %s93, %s96
      %p102 = scmp.eq.s32.totalorder %s15, 0
      %p103 = por %p101, %p102
      %p104 = scmp.ne.s32.totalorder %s93, %s96
      %p105 = scmp.eq.s32.totalorder %s20, 1
      %p106 = por %p104, %p105
      %p107 = scmp.ne.s32.totalorder %s96, %s97
      %p108 = scmp.eq.s32.totalorder %s20, 0
      %p109 = por %p107, %p108
      %p110 = scmp.ne.s32.totalorder %s96, %s97
      %p111 = scmp.eq.s32.totalorder %s21, 1
      %p112 = por %p110, %p111
      %p114 = scmp.ne.s32.totalorder %s97, %s113
      %p115 = scmp.eq.s32.totalorder %s21, 0
      %p116 = por %p114, %p115
      %p117 = scmp.le.s32.totalorder 1, %s15
      %p118 = scmp.lt.s32.totalorder %s15, 3
      %p119 = pnand %p117, %p118
      %p120 = pneg %p119
      // Predicated region
      $region9: #{tpu_custom_call.1} parent=5 // pred_check
        _
      $region10: #{tpu_custom_call.1} parent=5 // pred_check_branch
        %122 = sbr.rel (%p119) target = $region12
      $region11: #{tpu_custom_call.1} parent=5 // pred_region
        %s123 = ssub.s32 %s15, 1
        // Predicated region
        $region13: #{tpu_custom_call.1} parent=11 // pred_check
          %p124 = pneg %p81
        $region14: #{tpu_custom_call.1} parent=11 // pred_check_branch
          %126 = sbr.rel (%p124) target = $region16
        $region15: #{tpu_custom_call.1} parent=11 // pred_region
          %s128 = ssub.s32 128, 128
          %129 = vsyncadd [#allocation6], %s128
          %s130 = smul.addr %s24, 128
          %s131 = scalar_lea.hbm %s1, %s130
          %s133 = sshll.u32 [#allocation5], 4
          %s134 = int_to_ptr.vmem [resolvable:$true] %s133
          %136 = dma.hbm_to_vmem [thread:$0]  %s131, 128, %s134, [#allocation6]
        $region16: #{tpu_custom_call.1} parent=11 // pred_fallthru
          _
      $region12: #{tpu_custom_call.1} parent=5 // pred_fallthru
        _
      %p137 = scmp.lt.s32.totalorder %s15, 2
      // Predicated region
      $region17: #{tpu_custom_call.1} parent=5 // pred_check
        %p138 = pneg %p137
      $region18: #{tpu_custom_call.1} parent=5 // pred_check_branch
        %140 = sbr.rel (%p138) target = $region20
      $region19: #{tpu_custom_call.1} parent=5 // pred_region
        // Predicated region
        $region21: #{tpu_custom_call.1} parent=19 // pred_check
          %p141 = pneg %p49
        $region22: #{tpu_custom_call.1} parent=19 // pred_check_branch
          %143 = sbr.rel (%p141) target = $region24
        $region23: #{tpu_custom_call.1} parent=19 // pred_region
          %s144 = sand.u32 %s39, 1
          %s145 = scalar_lea.sflag [#allocation3], %s144
          %s146 = sand.u32 %s39, 1
          %s147 = smul.addr %s146, 8
          %s148 = scalar_lea.vmem [#allocation2], %s147
          %s149 = smul.u32 4, %s22
          %s150 = ssub.s32 1, %s149
          %s151 = smul.u32 32, %s150
          %s153 = ssub.s32 128, %s151
          %154 = vsyncadd %s145, %s153
          %p155 = scmp.ne.s32.totalorder 0, %s151
          %s156 = sadd.s32 %s149, %s23
          %s157 = smul.addr %s156, 32
          %s158 = scalar_lea.hbm %s0, %s157
          %s159 = smul.u32 2, %s150
          %s160 = sshll.u32 %s148, 4
          %s161 = int_to_ptr.vmem [resolvable:$true] %s160
          %s162 = sshll.u32 %s159, 4
          %166 = dma.hbm_to_vmem [thread:$0]  (%p155), %s158, %s162, %s161, %s145, 32, 32, 2
        $region24: #{tpu_custom_call.1} parent=19 // pred_fallthru
          _
      $region20: #{tpu_custom_call.1} parent=5 // pred_fallthru
        _
      %p167 = scmp.le.s32.totalorder 1, %s15
      %p168 = scmp.lt.s32.totalorder %s15, 3
      %p169 = pnand %p167, %p168
      %p170 = pneg %p169
      // Predicated region
      $region25: #{tpu_custom_call.1} parent=5 // pred_check
        _
      $region26: #{tpu_custom_call.1} parent=5 // pred_check_branch
        %172 = sbr.rel (%p169) target = $region28
      $region27: #{tpu_custom_call.1} parent=5 // pred_region
        %s173 = ssub.s32 %s15, 1
        %s174 = sand.u32 %s42, 1
        %s175 = scalar_lea.sflag [#allocation3], %s174
        %s176 = sand.u32 %s42, 1
        %s177 = smul.addr %s176, 8
        %s178 = scalar_lea.vmem [#allocation2], %s177
        // Predicated region
        $region29: #{tpu_custom_call.1} parent=27 // pred_check
          %p179 = pneg %p55
        $region30: #{tpu_custom_call.1} parent=27 // pred_check_branch
          %181 = sbr.rel (%p179) target = $region32
        $region31: #{tpu_custom_call.1} parent=27 // pred_region
          %182 = dma.done %s175, 128
        $region32: #{tpu_custom_call.1} parent=27 // pred_fallthru
          _
        // Predicated region
        $region33: #{tpu_custom_call.1} parent=27 // pred_check
          %p183 = pneg %p81
        $region34: #{tpu_custom_call.1} parent=27 // pred_check_branch
          %185 = sbr.rel (%p183) target = $region36
        $region35: #{tpu_custom_call.1} parent=27 // pred_region
          %186 = dma.done [#allocation6], 128
        $region36: #{tpu_custom_call.1} parent=27 // pred_fallthru
          _
        %s187 = sand.u32 %s42, 1
        %s188 = scalar_lea.sflag [#allocation3], %s187
        %s189 = sand.u32 %s42, 1
        %s190 = smul.addr %s189, 8
        %s191 = scalar_lea.vmem [#allocation2], %s190
        %p192 = pneg %p55
        %p193 = pneg %p52
        %p194 = pneg %p81
        %p195 = pneg %p78
        %p196 = pneg %p109
        %p197 = pneg %p106
        %s198 = sand.u32 %s96, 1
        %s199 = scalar_lea.sflag [#allocation4], %s198
        %s200 = sand.u32 %s96, 1
        %s201 = smul.addr %s200, 8
        %s202 = scalar_lea.vmem [#allocation7], %s201
        %s203 = smul.u32 4, %s24
        %s204 = ssub.s32 1, %s203
        %s205 = smul.u32 32, %s204
        %s206 = smul.u32 4, %s24
        %s207 = ssub.s32 1, %s206
        %s208 = smul.u32 32, %s207
        %v209 = vld [vmem:[%s178] sm:$0xff]
        %v210 = vld [vmem:[#allocation5] sm:$0xff]
        %v211 = vadd.f32 %v209, %v210
        %212 = vst [vmem:[%s202] sm:$0xff] %v211
        %s213 = sand.u32 %s96, 1
        %s214 = scalar_lea.sflag [#allocation4], %s213
        %s215 = sand.u32 %s96, 1
        %s216 = smul.addr %s215, 8
        %s217 = scalar_lea.vmem [#allocation7], %s216
        // Predicated region
        $region37: #{tpu_custom_call.1} parent=27 // pred_check
          %p218 = pneg %p106
        $region38: #{tpu_custom_call.1} parent=27 // pred_check_branch
          %220 = sbr.rel (%p218) target = $region40
        $region39: #{tpu_custom_call.1} parent=27 // pred_region
          %s221 = smul.u32 4, %s24
          %s222 = ssub.s32 1, %s221
          %s223 = smul.u32 32, %s222
          %s225 = ssub.s32 128, %s223
          %226 = vsyncadd %s214, %s225
          %p227 = scmp.ne.s32.totalorder 0, %s223
          %s228 = sadd.s32 %s221, %s25
          %s229 = smul.addr %s228, 32
          %s230 = scalar_lea.hbm %s2, %s229
          %s231 = smul.u32 2, %s222
          %s232 = sshll.u32 %s217, 4
          %s233 = int_to_ptr.vmem [resolvable:$true] %s232
          %s234 = sshll.u32 %s231, 4
          %238 = dma.vmem_to_hbm [thread:$0]  (%p227), %s233, %s234, %s230, %s214, 32, 32, 2
        $region40: #{tpu_custom_call.1} parent=27 // pred_fallthru
          _
      $region28: #{tpu_custom_call.1} parent=5 // pred_fallthru
        _
      %p239 = scmp.le.s32.totalorder 2, %s15
      // Predicated region
      $region41: #{tpu_custom_call.1} parent=5 // pred_check
        %p240 = pneg %p239
      $region42: #{tpu_custom_call.1} parent=5 // pred_check_branch
        %242 = sbr.rel (%p240) target = $region44
      $region43: #{tpu_custom_call.1} parent=5 // pred_region
        %s243 = ssub.s32 %s15, 2
        // Predicated region
        $region45: #{tpu_custom_call.1} parent=43 // pred_check
          %p244 = pneg %p112
        $region46: #{tpu_custom_call.1} parent=43 // pred_check_branch
          %246 = sbr.rel (%p244) target = $region48
        $region47: #{tpu_custom_call.1} parent=43 // pred_region
          %s247 = sand.u32 %s97, 1
          %s248 = scalar_lea.sflag [#allocation4], %s247
          %s249 = sand.u32 %s97, 1
          %s250 = smul.addr %s249, 8
          %s251 = scalar_lea.vmem [#allocation7], %s250
          %252 = dma.done %s248, 128
        $region48: #{tpu_custom_call.1} parent=43 // pred_fallthru
          _
      $region44: #{tpu_custom_call.1} parent=5 // pred_fallthru
        _
    $region6: #{tpu_custom_call.1} parent=1 // loop_footer
      %s19 = sadd.s32 1, %s15
    $region7: #{tpu_custom_call.1} parent=1 // loop_footer_branch
      %14 = sbr.rel target = $region3
    $region8: #{tpu_custom_call.1} parent=1 // loop_exit
      _
    %253 = vsyncpa [#allocation3], 1
    %s254 = scalar_lea.sflag [#allocation3], 1
    %255 = vsyncpa %s254, 1
    %256 = vsyncpa [#allocation6], 1
    %257 = vsyncpa [#allocation4], 1
    %s258 = scalar_lea.sflag [#allocation4], 1
    %259 = vsyncpa %s258, 1

</llo_original>
